<compile_context>
chip_gen: v5e
topology: v5e:2x2
jax: 0.10.0
libtpu: 0.0.40
codegen_flags: <defaults>
</compile_context>

<pallas_src>
import functools
import math

import jax
import jax.numpy as jnp
from jax.experimental import pallas as pl
from jax.experimental.pallas import tpu as pltpu

_MASK_VALUE = -1e30                      # large finite negative
_VMEM_LIMIT = 48 * 1024 * 1024           # scoped VMEM cap (safe on v5e/v6e/v7x)
_LINEAR_VMEM_BUDGET = 20 * 1024 * 1024   # double-buffered tile footprint target


# ------------------------------ tile selection ------------------------------

def _pick_tile(dim, candidates):
    """Largest candidate that divides dim, else the full dim (always legal)."""
    for c in candidates:
        if dim % c == 0:
            return c
    return dim


def _pick_linear_tiles(M, K, N, itemsize):
    """Large tiles, capped so the double-buffered footprint stays in budget."""
    tk = K if K <= 2048 else _pick_tile(K, (2048, 1536, 1024, 768, 512, 384, 256, 128))
    tn = _pick_tile(N, (768, 512, 384, 256, 128))
    tm = M  # fallback (e.g. prime M); TODO(synk): add a padding path for huge prime M
    for cand in (1024, 512, 256, 128, 64, 32, 16, 8):
        if M % cand:
            continue
        buf = 2 * (cand * tk + tk * tn + cand * tn) * itemsize
        if tk != K:
            buf += cand * tn * 4          # f32 accumulator scratch
        if buf <= _LINEAR_VMEM_BUDGET:
            tm = cand
            break
    return tm, tn, tk


# -------------------------- tiled linear: x @ W + b --------------------------

def _linear_kernel_noacc(x_ref, w_ref, b_ref, o_ref):
    # Whole K in one shot: no accumulator scratch, no init/finalize branches.
    acc = jnp.dot(x_ref[...], w_ref[...], preferred_element_type=jnp.float32)
    o_ref[...] = (acc + b_ref[...].astype(jnp.float32)).astype(o_ref.dtype)


def _linear_kernel_acc(x_ref, w_ref, b_ref, o_ref, acc_ref):
    k = pl.program_id(2)

    @pl.when(k == 0)
    def _init():
        acc_ref[...] = jnp.zeros_like(acc_ref)

    acc_ref[...] += jnp.dot(x_ref[...], w_ref[...],
                            preferred_element_type=jnp.float32)

    @pl.when(k == pl.num_programs(2) - 1)
    def _finalize():
        o_ref[...] = (acc_ref[...] + b_ref[...].astype(jnp.float32)).astype(o_ref.dtype)


def pallas_linear(x2d, w, b):
    """x2d: (M, K), w: (K, N), b: (N,) -> (M, N)."""
    M, K = x2d.shape
    Kw, N = w.shape
    assert K == Kw
    itemsize = x2d.dtype.itemsize
    tm, tn, tk = _pick_linear_tiles(M, K, N, itemsize)

    cost = pl.CostEstimate(
        flops=2 * M * N * K,
        transcendentals=0,
        bytes_accessed=(M * K * (N // tn) + K * N * (M // tm) + M * N + N) * itemsize,
    )
    b2 = b.reshape(1, N)

    if tk == K:
        return pl.pallas_call(
            _linear_kernel_noacc,
            out_shape=jax.ShapeDtypeStruct((M, N), x2d.dtype),
            grid=(M // tm, N // tn),
            in_specs=[
                pl.BlockSpec((tm, K), lambda i, j: (i, 0)),
                pl.BlockSpec((K, tn), lambda i, j: (0, j)),
                pl.BlockSpec((1, tn), lambda i, j: (0, j)),
            ],
            out_specs=pl.BlockSpec((tm, tn), lambda i, j: (i, j)),
            compiler_params=pltpu.CompilerParams(
                dimension_semantics=("parallel", "parallel"),
                vmem_limit_bytes=_VMEM_LIMIT),
            cost_estimate=cost,
        )(x2d, w, b2)

    return pl.pallas_call(
        _linear_kernel_acc,
        out_shape=jax.ShapeDtypeStruct((M, N), x2d.dtype),
        grid=(M // tm, N // tn, K // tk),
        in_specs=[
            pl.BlockSpec((tm, tk), lambda i, j, k: (i, k)),
            pl.BlockSpec((tk, tn), lambda i, j, k: (k, j)),
            pl.BlockSpec((1, tn), lambda i, j, k: (0, j)),
        ],
        out_specs=pl.BlockSpec((tm, tn), lambda i, j, k: (i, j)),
        scratch_shapes=[pltpu.VMEM((tm, tn), jnp.float32)],
        compiler_params=pltpu.CompilerParams(
            dimension_semantics=("parallel", "parallel", "arbitrary"),
            vmem_limit_bytes=_VMEM_LIMIT),
        cost_estimate=cost,
    )(x2d, w, b2)


# --------------------- flash-style causal self-attention ---------------------
#
# Grid: (B, num_triangular_steps).  Scalar-prefetch arrays q_ids / kv_ids map
# each step to its (q_block, kv_block) with kv_block <= q_block, so no grid
# iteration is fully masked.  Scratch accumulators persist across the kv sweep
# of each q block: init at kv_block == 0, finalize (mask + output) at the
# diagonal block kv_block == q_block.

def _flash_attn_kernel(q_ids_ref, kv_ids_ref, q_ref, k_ref, v_ref, o_ref,
                       m_sc, l_sc, acc_sc, *, n_head, head_dim, block_q, block_k):
    step = pl.program_id(1)
    qi = q_ids_ref[step]
    ki = kv_ids_ref[step]

    @pl.when(ki == 0)
    def _init():
        m_sc[...] = jnp.full_like(m_sc, -jnp.inf)
        l_sc[...] = jnp.zeros_like(l_sc)
        acc_sc[...] = jnp.zeros_like(acc_sc)

    def _head_update(h, keep):
        # Static column slices: no per-step head reshape / relayout, and only
        # one head's (block, block) score tile is live at a time.
        off = h * head_dim
        q_h = q_ref[0, :, off:off + head_dim]          # (bq, hd) input dtype
        k_h = k_ref[0, :, off:off + head_dim]          # (bk, hd)
        v_h = v_ref[0, :, off:off + head_dim]          # (bk, hd)
        s = jax.lax.dot_general(                       # q_h @ k_h^T, f32 acc
            q_h, k_h, (((1,), (1,)), ((), ())),
            preferred_element_type=jnp.float32)        # (bq, bk)
        if keep is not None:                           # only the diagonal block
            s = jnp.where(keep, s, _MASK_VALUE)
        m_prev = m_sc[h]                               # (bq, 1)
        m_new = jnp.maximum(m_prev, jnp.max(s, axis=-1, keepdims=True))
        alpha = jnp.exp(m_prev - m_new)
        p = jnp.exp(s - m_new)
        l_sc[h] = alpha * l_sc[h] + jnp.sum(p, axis=-1, keepdims=True)
        acc_sc[h] = alpha * acc_sc[h] + jnp.dot(
            p.astype(v_h.dtype), v_h, preferred_element_type=jnp.float32)
        m_sc[h] = m_new

    is_diag = ki == qi

    @pl.when(jnp.logical_not(is_diag))
    def _off_diagonal():                               # fully visible block
        for h in range(n_head):
            _head_update(h, None)

    @pl.when(is_diag)                                  # diagonal == last kv step
    def _diagonal_and_finalize():
        row = jax.lax.broadcasted_iota(jnp.int32, (block_q, block_k), 0)
        col = jax.lax.broadcasted_iota(jnp.int32, (block_q, block_k), 1)
        keep = col <= row
        for h in range(n_head):
            _head_update(h, keep)
        # exact f32 division (approx reciprocal was outside tolerance)
        for h in range(n_head):
            off = h * head_dim
            o_ref[0, :, off:off + head_dim] = (
                acc_sc[h] / l_sc[h]).astype(o_ref.dtype)


def pallas_causal_attention(qkv, n_head):
    """qkv: (B, T, 3C), heads packed along C, q|k|v packed along last dim.

    Returns causal attention output (B, T, C).  The 1/sqrt(head_dim) scale is
    expected to be already folded into q (done in causal_self_attention).
    """
    B, T, C3 = qkv.shape
    C = C3 // 3
    head_dim = C // n_head
    dtype = qkv.dtype

    blk = _pick_tile(T, (256, 128, 64, 32, 16, 8))
    nb = T // blk

    # Flattened lower-triangular (q_block, kv_block) schedule.
    q_ids, kv_ids = [], []
    for qb in range(nb):
        for kb in range(qb + 1):
            q_ids.append(qb)
            kv_ids.append(kb)
    steps = len(q_ids)
    q_ids = jnp.asarray(q_ids, jnp.int32)
    kv_ids = jnp.asarray(kv_ids, jnp.int32)

    if C % 128 == 0:
        # Index q/k/v directly out of the packed qkv array (no HBM split).
        q_in = k_in = v_in = qkv
        q_spec = pl.BlockSpec((1, blk, C), lambda b, s, qid, kid: (b, qid[s], 0))
        k_spec = pl.BlockSpec((1, blk, C), lambda b, s, qid, kid: (b, kid[s], 1))
        v_spec = pl.BlockSpec((1, blk, C), lambda b, s, qid, kid: (b, kid[s], 2))
    else:
        # Last-dim block of size C inside (B, T, 3C) would violate the 128-lane
        # rule; fall back to materialized splits (block last dim == full dim).
        q_in, k_in, v_in = jnp.split(qkv, 3, axis=2)
        q_spec = pl.BlockSpec((1, blk, C), lambda b, s, qid, kid: (b, qid[s], 0))
        k_spec = pl.BlockSpec((1, blk, C), lambda b, s, qid, kid: (b, kid[s], 0))
        v_spec = pl.BlockSpec((1, blk, C), lambda b, s, qid, kid: (b, kid[s], 0))
    out_spec = pl.BlockSpec((1, blk, C), lambda b, s, qid, kid: (b, qid[s], 0))

    cost = pl.CostEstimate(
        flops=4 * B * n_head * head_dim * steps * blk * blk,      # QK^T + PV (causal)
        transcendentals=B * n_head * steps * blk * blk,
        bytes_accessed=dtype.itemsize * B * blk * C * (2 * steps + 2 * nb),
    )

    kernel = functools.partial(
        _flash_attn_kernel, n_head=n_head, head_dim=head_dim,
        block_q=blk, block_k=blk)

    return pl.pallas_call(
        kernel,
        out_shape=jax.ShapeDtypeStruct((B, T, C), dtype),
        grid_spec=pltpu.PrefetchScalarGridSpec(
            num_scalar_prefetch=2,
            grid=(B, steps),
            in_specs=[q_spec, k_spec, v_spec],
            out_specs=out_spec,
            scratch_shapes=[
                pltpu.VMEM((n_head, blk, 1), jnp.float32),          # running max m
                pltpu.VMEM((n_head, blk, 1), jnp.float32),          # running sum l
                pltpu.VMEM((n_head, blk, head_dim), jnp.float32),   # output acc
            ]),
        compiler_params=pltpu.CompilerParams(
            dimension_semantics=("parallel", "arbitrary"),
            vmem_limit_bytes=_VMEM_LIMIT),
        cost_estimate=cost,
    )(q_ids, kv_ids, q_in, k_in, v_in)


# -------------------------------- module glue --------------------------------

def init_params(key, n_embed, add_bias=True, dtype=jnp.float32):
    """PyTorch-Linear-style init: U(-1/sqrt(fan_in), 1/sqrt(fan_in))."""
    k1, k2, k3, k4 = jax.random.split(key, 4)
    bound = 1.0 / math.sqrt(n_embed)
    params = {
        "w_attn": jax.random.uniform(k1, (n_embed, 3 * n_embed), dtype, -bound, bound),
        "w_proj": jax.random.uniform(k2, (n_embed, n_embed), dtype, -bound, bound),
    }
    if add_bias:
        params["b_attn"] = jax.random.uniform(k3, (3 * n_embed,), dtype, -bound, bound)
        params["b_proj"] = jax.random.uniform(k4, (n_embed,), dtype, -bound, bound)
    else:
        params["b_attn"] = jnp.zeros((3 * n_embed,), dtype)
        params["b_proj"] = jnp.zeros((n_embed,), dtype)
    return params


def causal_self_attention(params, x, n_head):
    B, T, C = x.shape
    head_dim = C // n_head
    scale = 1.0 / math.sqrt(head_dim)

    # Fold the attention scale into the q columns of c_attn (mathematically
    # identical; ideally done once at parameter-setup time).
    w_attn = jnp.concatenate(
        [params["w_attn"][:, :C] * scale, params["w_attn"][:, C:]], axis=1)
    b_attn = jnp.concatenate(
        [params["b_attn"][:C] * scale, params["b_attn"][C:]], axis=0)

    # c_attn: (B*T, C) @ (C, 3C) + b  -> packed qkv, no HBM split needed.
    qkv = pallas_linear(x.reshape(B * T, C), w_attn, b_attn).reshape(B, T, 3 * C)

    # Flash causal attention in (B, T, C) layout (heads split inside the kernel).
    # TODO(synk): attn/resid dropout omitted (identity in eval mode).
    y = pallas_causal_attention(qkv, n_head)

    # c_proj
    y = pallas_linear(y.reshape(B * T, C), params["w_proj"], params["b_proj"])
    return y.reshape(B, T, C)


# ------------------------------------ main ------------------------------------

if __name__ == "__main__":
    # Small but TPU-friendly shapes: C a multiple of 128 exercises the packed
    # qkv path; head_dim = 32.
    B, T, C, H = 2, 16, 128, 4

    key = jax.random.PRNGKey(0)
    kx, kp = jax.random.split(key)
    x = jax.random.normal(kx, (B, T, C), dtype=jnp.float32)
    params = init_params(kp, C, add_bias=True)

    y = causal_self_attention(params, x, n_head=H)
    jax.block_until_ready(y)
    assert y.shape == (B, T, C)

    # Pure-JAX reference (matches the PyTorch forward), HIGHEST-precision dots.
    def ref(params, x):
        hp = jax.lax.Precision.HIGHEST
        x2 = x.reshape(B * T, C)
        qkv = jnp.dot(x2, params["w_attn"], precision=hp) + params["b_attn"]
        qkv = qkv.reshape(B, T, 3 * C)
        q, k, v = jnp.split(qkv, 3, axis=2)
        q = q.reshape(B, T, H, C // H).transpose(0, 2, 1, 3)
        k = k.reshape(B, T, H, C // H).transpose(0, 2, 1, 3)
        v = v.reshape(B, T, H, C // H).transpose(0, 2, 1, 3)
        s = jnp.einsum("bhqd,bhkd->bhqk", q, k, precision=hp) / math.sqrt(C // H)
        mask = jnp.tril(jnp.ones((T, T), dtype=bool))
        s = jnp.where(mask[None, None], s, -jnp.inf)
        p = jax.nn.softmax(s, axis=-1)
        yr = jnp.einsum("bhqk,bhkd->bhqd", p, v, precision=hp)
        yr = yr.transpose(0, 2, 1, 3).reshape(B * T, C)
        yr = jnp.dot(yr, params["w_proj"], precision=hp) + params["b_proj"]
        return yr.reshape(B, T, C)

    y_ref = ref(params, x)
    # Tolerance sized for TPU f32-matmul numerics (kernel dots use the MXU's
    # default f32 path); structural bugs produce errors orders of magnitude larger.
    err = float(jnp.max(jnp.abs(y - y_ref)))
    assert jnp.allclose(y, y_ref, atol=5e-3, rtol=5e-3), err

    print("KERNEL_OK")
</pallas_src>

<mosaic_0001>
module attributes {stable_mosaic.version = 11 : i64} {
  func.func @_linear_kernel_noacc(%arg0: i32, %arg1: i32, %arg2: memref<32x128xf32, #tpu.memory_space<vmem>>, %arg3: memref<128x384xf32, #tpu.memory_space<vmem>>, %arg4: memref<1x384xf32, #tpu.memory_space<vmem>>, %arg5: memref<32x384xf32, #tpu.memory_space<vmem>>) attributes {dimension_semantics = [#tpu.dimension_semantics<parallel>, #tpu.dimension_semantics<parallel>], iteration_bounds = array<i64: 1, 1>, scalar_prefetch = 0 : i64, scratch_operands = 0 : i64, tpu.core_type = #tpu.core_type<tc>, window_params = [{transform_indices = @transform_0, window_bounds = array<i64: 32, 128>}, {transform_indices = @transform_1, window_bounds = array<i64: 128, 384>}, {transform_indices = @transform_2, window_bounds = array<i64: 1, 384>}, {transform_indices = @transform_3, window_bounds = array<i64: 32, 384>}]} {
    %c0 = arith.constant 0 : index
    %c0_0 = arith.constant 0 : index
    %0 = vector.load %arg2[%c0, %c0_0] : memref<32x128xf32, #tpu.memory_space<vmem>>, vector<32x128xf32>
    %c0_1 = arith.constant 0 : index
    %c0_2 = arith.constant 0 : index
    %1 = vector.load %arg3[%c0_1, %c0_2] : memref<128x384xf32, #tpu.memory_space<vmem>>, vector<128x384xf32>
    %cst = arith.constant dense<0.000000e+00> : vector<32x384xf32>
    %2 = tpu.matmul %0, %1, %cst {dimension_numbers = #tpu.dot_dimension_numbers<[1], [0], [0], [1], [0, 0, 1, 1], [], []>} : vector<32x128xf32>, vector<128x384xf32>, vector<32x384xf32> -> vector<32x384xf32>
    %c0_3 = arith.constant 0 : index
    %c0_4 = arith.constant 0 : index
    %3 = vector.load %arg4[%c0_3, %c0_4] : memref<1x384xf32, #tpu.memory_space<vmem>>, vector<1x384xf32>
    %4 = vector.broadcast %3 : vector<1x384xf32> to vector<32x384xf32>
    %5 = arith.addf %2, %4 : vector<32x384xf32>
    %c0_5 = arith.constant 0 : index
    %c0_6 = arith.constant 0 : index
    %6 = vector.load %arg5[%c0_5, %c0_6] : memref<32x384xf32, #tpu.memory_space<vmem>>, vector<32x384xf32>
    tpu.vector_store %arg5[%c0_5, %c0_6], %5 {strides = array<i32>} : memref<32x384xf32, #tpu.memory_space<vmem>>, vector<32x384xf32>,
    return
  }
  func.func @transform_0(%arg0: i32, %arg1: i32) -> (i32, i32) {
    %c0_i32 = arith.constant 0 : i32
    %c0_i32_0 = arith.constant 0 : i32
    return %arg0, %c0_i32 : i32, i32
  }
  func.func @transform_1(%arg0: i32, %arg1: i32) -> (i32, i32) {
    %c0_i32 = arith.constant 0 : i32
    %c0_i32_0 = arith.constant 0 : i32
    return %c0_i32, %arg1 : i32, i32
  }
  func.func @transform_2(%arg0: i32, %arg1: i32) -> (i32, i32) {
    %c0_i32 = arith.constant 0 : i32
    %c0_i32_0 = arith.constant 0 : i32
    return %c0_i32, %arg1 : i32, i32
  }
  func.func @transform_3(%arg0: i32, %arg1: i32) -> (i32, i32) {
    %c0_i32 = arith.constant 0 : i32
    return %arg0, %arg1 : i32, i32
  }
}

</mosaic_0001>

<llo_original>
// kernel: tpu_custom_call.1
$region0: #{tpu_custom_call.1}
  #allocation0 [shape = 'u32[]', space=smem, size = 0x4, offset = 0x4, fixed_abs, tag = 'smem constant byte address 0x4 - core index']
  #allocation1 [shape = 'u32[72,128]{1,0:T(1,128)}', space=vmem, size = 0x9000, scoped, tag = 'internal scratch']
  %s0 = inlined_call_operand.hbm [shape: f32[32,128], index: 0, kind: input, shape index: {}]
  %s1 = inlined_call_operand.hbm [shape: f32[128,384], index: 1, kind: input, shape index: {}]
  %s2 = inlined_call_operand.hbm [shape: f32[1,384], index: 2, kind: input, shape index: {}]
  %s3 = inlined_call_operand.hbm [shape: f32[32,384], index: 3, kind: output, shape index: {}]
  %s4 = sld [smem:[#allocation0]]
  $region34: #{tpu_custom_call.1} parent=0
    _
  %s6 = ssub.s32 1, %s4
  %s7 = scalar_select 0, %s6, %s4
  $region1: #{tpu_custom_call.1} parent=0
    #allocation2 [shape = 'u8[16384]{0}', space=vmem, size = 0x4000, scoped, tag = 'input window, operand 0, single buffered']
    #allocation3 [shape = 's32[1]{0}', space=sflag, size = 0x4, scoped, tag = 'scoped memory for tpu_custom_call.1']
    #allocation4 [shape = 's32[1]{0}', space=sflag, size = 0x4, scoped, tag = 'scoped memory for tpu_custom_call.1']
    #allocation5 [shape = 'u8[196608]{0}', space=vmem, size = 0x30000, scoped, tag = 'input window, operand 1, single buffered']
    #allocation6 [shape = 's32[1]{0}', space=sflag, size = 0x4, scoped, tag = 'scoped memory for tpu_custom_call.1']
    #allocation7 [shape = 'u8[1536]{0}', space=vmem, size = 0x800, scoped, tag = 'input window, operand 2, single buffered']
    #allocation8 [shape = 'u8[49152]{0}', space=vmem, size = 0xc000, scoped, tag = 'output window, operand 0, single buffered']
    %8 = vsyncpa [#allocation3], 0
    %9 = vsyncpa [#allocation6], 0
    %10 = vsyncpa [#allocation4], 0
    // Predicated region
    $region2: #{tpu_custom_call.1} parent=1 // pred_check
      _
    $region3: #{tpu_custom_call.1} parent=1 // pred_check_branch
      %12 = sbr.rel (0) target = $region5
    $region4: #{tpu_custom_call.1} parent=1 // pred_region
      %14 = vsyncadd [#allocation3], 0
      %s15 = sshll.u32 %s0, 4
      %s16 = int_to_ptr.hbm [resolvable:$true] %s15
      %s17 = sshll.u32 [#allocation2], 4
      %s18 = int_to_ptr.vmem [resolvable:$true] %s17
      %23 = dma.hbm_to_vmem [thread:$0]  %s16, 512, %s18, [#allocation3], 128, 128, 8
    $region5: #{tpu_custom_call.1} parent=1 // pred_fallthru
      _
    // Predicated region
    $region6: #{tpu_custom_call.1} parent=1 // pred_check
      _
    $region7: #{tpu_custom_call.1} parent=1 // pred_check_branch
      %25 = sbr.rel (0) target = $region9
    $region8: #{tpu_custom_call.1} parent=1 // pred_region
      %27 = vsyncadd [#allocation6], 0
      %s28 = sshll.u32 %s1, 4
      %s29 = int_to_ptr.hbm [resolvable:$true] %s28
      %s30 = sshll.u32 [#allocation5], 4
      %s31 = int_to_ptr.vmem [resolvable:$true] %s30
      %36 = dma.hbm_to_vmem [thread:$0]  %s29, 6144, %s31, [#allocation6], 384, 384, 24
    $region9: #{tpu_custom_call.1} parent=1 // pred_fallthru
      _
    // Predicated region
    $region10: #{tpu_custom_call.1} parent=1 // pred_check
      _
    $region11: #{tpu_custom_call.1} parent=1 // pred_check_branch
      %38 = sbr.rel (0) target = $region13
    $region12: #{tpu_custom_call.1} parent=1 // pred_region
      %40 = vsyncadd [#allocation6], 0
      %s42 = sshll.u32 %s2, 4
      %s43 = int_to_ptr.hbm [resolvable:$true] %s42
      %s44 = sshll.u32 [#allocation7], 4
      %s45 = int_to_ptr.vmem [resolvable:$true] %s44
      %47 = dma.hbm_to_vmem [thread:$0]  %s43, 48, %s45, [#allocation6]
    $region13: #{tpu_custom_call.1} parent=1 // pred_fallthru
      _
    // Predicated region
    $region14: #{tpu_custom_call.1} parent=1 // pred_check
      _
    $region15: #{tpu_custom_call.1} parent=1 // pred_check_branch
      %49 = sbr.rel (0) target = $region17
    $region16: #{tpu_custom_call.1} parent=1 // pred_region
      %51 = dma.done [#allocation3], 512
    $region17: #{tpu_custom_call.1} parent=1 // pred_fallthru
      _
    // Predicated region
    $region18: #{tpu_custom_call.1} parent=1 // pred_check
      _
    $region19: #{tpu_custom_call.1} parent=1 // pred_check_branch
      %53 = sbr.rel (0) target = $region21
    $region20: #{tpu_custom_call.1} parent=1 // pred_region
      %55 = dma.done [#allocation6], 6144
    $region21: #{tpu_custom_call.1} parent=1 // pred_fallthru
      _
    // Predicated region
    $region22: #{tpu_custom_call.1} parent=1 // pred_check
      _
    $region23: #{tpu_custom_call.1} parent=1 // pred_check_branch
      %57 = sbr.rel (0) target = $region25
    $region24: #{tpu_custom_call.1} parent=1 // pred_region
      %59 = dma.done [#allocation6], 48
    $region25: #{tpu_custom_call.1} parent=1 // pred_fallthru
      _
    %v60 = vld [vmem:[#allocation2] sm:$0xff]
    %v61 = vld [vmem:[#allocation2 + $0x8] sm:$0xff]
    %v62 = vld [vmem:[#allocation2 + $0x10] sm:$0xff]
    %v63 = vld [vmem:[#allocation2 + $0x18] sm:$0xff]
    %v64 = vld [vmem:[#allocation5] sm:$0xff]
    %v65 = vld [vmem:[#allocation5 + $0x8] sm:$0xff]
    %v66 = vld [vmem:[#allocation5 + $0x10] sm:$0xff]
    %v67 = vld [vmem:[#allocation5 + $0x18] sm:$0xff]
    %v68 = vld [vmem:[#allocation5 + $0x20] sm:$0xff]
    %v69 = vld [vmem:[#allocation5 + $0x28] sm:$0xff]
    %v70 = vld [vmem:[#allocation5 + $0x30] sm:$0xff]
    %v71 = vld [vmem:[#allocation5 + $0x38] sm:$0xff]
    %v72 = vld [vmem:[#allocation5 + $0x40] sm:$0xff]
    %v73 = vld [vmem:[#allocation5 + $0x48] sm:$0xff]
    %v74 = vld [vmem:[#allocation5 + $0x50] sm:$0xff]
    %v75 = vld [vmem:[#allocation5 + $0x58] sm:$0xff]
    %v76 = vld [vmem:[#allocation5 + $0x60] sm:$0xff]
    %v77 = vld [vmem:[#allocation5 + $0x68] sm:$0xff]
    %v78 = vld [vmem:[#allocation5 + $0x70] sm:$0xff]
    %v79 = vld [vmem:[#allocation5 + $0x78] sm:$0xff]
    %v80 = vld [vmem:[#allocation5 + $0x80] sm:$0xff]
    %v81 = vld [vmem:[#allocation5 + $0x88] sm:$0xff]
    %v82 = vld [vmem:[#allocation5 + $0x90] sm:$0xff]
    %v83 = vld [vmem:[#allocation5 + $0x98] sm:$0xff]
    %v84 = vld [vmem:[#allocation5 + $0xa0] sm:$0xff]
    %v85 = vld [vmem:[#allocation5 + $0xa8] sm:$0xff]
    %v86 = vld [vmem:[#allocation5 + $0xb0] sm:$0xff]
    %v87 = vld [vmem:[#allocation5 + $0xb8] sm:$0xff]
    %v88 = vld [vmem:[#allocation5 + $0xc0] sm:$0xff]
    %v89 = vld [vmem:[#allocation5 + $0xc8] sm:$0xff]
    %v90 = vld [vmem:[#allocation5 + $0xd0] sm:$0xff]
    %v91 = vld [vmem:[#allocation5 + $0xd8] sm:$0xff]
    %v92 = vld [vmem:[#allocation5 + $0xe0] sm:$0xff]
    %v93 = vld [vmem:[#allocation5 + $0xe8] sm:$0xff]
    %v94 = vld [vmem:[#allocation5 + $0xf0] sm:$0xff]
    %v95 = vld [vmem:[#allocation5 + $0xf8] sm:$0xff]
    %v96 = vld [vmem:[#allocation5 + $0x100] sm:$0xff]
    %v97 = vld [vmem:[#allocation5 + $0x108] sm:$0xff]
    %v98 = vld [vmem:[#allocation5 + $0x110] sm:$0xff]
    %v99 = vld [vmem:[#allocation5 + $0x118] sm:$0xff]
    %v100 = vld [vmem:[#allocation5 + $0x120] sm:$0xff]
    %v101 = vld [vmem:[#allocation5 + $0x128] sm:$0xff]
    %v102 = vld [vmem:[#allocation5 + $0x130] sm:$0xff]
    %v103 = vld [vmem:[#allocation5 + $0x138] sm:$0xff]
    %v104 = vld [vmem:[#allocation5 + $0x140] sm:$0xff]
    %v105 = vld [vmem:[#allocation5 + $0x148] sm:$0xff]
    %v106 = vld [vmem:[#allocation5 + $0x150] sm:$0xff]
    %v107 = vld [vmem:[#allocation5 + $0x158] sm:$0xff]
    %v108 = vld [vmem:[#allocation5 + $0x160] sm:$0xff]
    %v109 = vld [vmem:[#allocation5 + $0x168] sm:$0xff]
    %v110 = vld [vmem:[#allocation5 + $0x170] sm:$0xff]
    %v111 = vld [vmem:[#allocation5 + $0x178] sm:$0xff]
    %v112 = vld [vmem:[#allocation7] sm:$0x7]
    %v114 = vperm.slane %v112, 0
    %v115 = vperm.slane %v112, 1
    %v116 = vperm.slane %v112, 2
    %120 = vmatpush.msra.mxu0 %v109
    %121 = vmatpush.msra.mxu0 %v106
    %122 = vmatpush.msra.mxu0 %v103
    %123 = vmatpush.msra.mxu0 %v100
    %124 = vmatpush.msra.mxu0 %v97
    %125 = vmatpush.msra.mxu0 %v94
    %126 = vmatpush.msra.mxu0 %v91
    %127 = vmatpush.msra.mxu0 %v88
    %128 = vmatpush.msra.mxu0 %v85
    %129 = vmatpush.msra.mxu0 %v82
    %130 = vmatpush.msra.mxu0 %v79
    %131 = vmatpush.msra.mxu0 %v76
    %132 = vmatpush.msra.mxu0 %v73
    %133 = vmatpush.msra.mxu0 %v70
    %134 = vmatpush.msra.mxu0 %v67
    %135 = vmatpush.msra.mxu0 %v64
    %136 = vmatmul.f32.gmra.mxu0 %v60
    %v137 = vpop.f32.mrf.mxu0
    %v138 = vadd.f32 %v114, %v137
    %139 = vmatmul.f32.gmra.mxu0 %v61
    %v140 = vpop.f32.mrf.mxu0
    %v141 = vadd.f32 %v114, %v140
    %142 = vmatmul.f32.gmra.mxu0 %v62
    %v143 = vpop.f32.mrf.mxu0
    %v144 = vadd.f32 %v114, %v143
    %145 = vmatmul.f32.gmra.mxu0 %v63
    %v146 = vpop.f32.mrf.mxu0
    %v147 = vadd.f32 %v114, %v146
    %148 = vdwg.mxu0
    %149 = vmatpush.msra.mxu0 %v110
    %150 = vmatpush.msra.mxu0 %v107
    %151 = vmatpush.msra.mxu0 %v104
    %152 = vmatpush.msra.mxu0 %v101
    %153 = vmatpush.msra.mxu0 %v98
    %154 = vmatpush.msra.mxu0 %v95
    %155 = vmatpush.msra.mxu0 %v92
    %156 = vmatpush.msra.mxu0 %v89
    %157 = vmatpush.msra.mxu0 %v86
    %158 = vmatpush.msra.mxu0 %v83
    %159 = vmatpush.msra.mxu0 %v80
    %160 = vmatpush.msra.mxu0 %v77
    %161 = vmatpush.msra.mxu0 %v74
    %162 = vmatpush.msra.mxu0 %v71
    %163 = vmatpush.msra.mxu0 %v68
    %164 = vmatpush.msra.mxu0 %v65
    %165 = vmatmul.f32.gmra.mxu0 %v60
    %v166 = vpop.f32.mrf.mxu0
    %v167 = vadd.f32 %v115, %v166
    %168 = vmatmul.f32.gmra.mxu0 %v61
    %v169 = vpop.f32.mrf.mxu0
    %v170 = vadd.f32 %v115, %v169
    %171 = vmatmul.f32.gmra.mxu0 %v62
    %v172 = vpop.f32.mrf.mxu0
    %v173 = vadd.f32 %v115, %v172
    %174 = vmatmul.f32.gmra.mxu0 %v63
    %v175 = vpop.f32.mrf.mxu0
    %v176 = vadd.f32 %v115, %v175
    %177 = vdwg.mxu0
    %178 = vmatpush.msra.mxu0 %v111
    %179 = vmatpush.msra.mxu0 %v108
    %180 = vmatpush.msra.mxu0 %v105
    %181 = vmatpush.msra.mxu0 %v102
    %182 = vmatpush.msra.mxu0 %v99
    %183 = vmatpush.msra.mxu0 %v96
    %184 = vmatpush.msra.mxu0 %v93
    %185 = vmatpush.msra.mxu0 %v90
    %186 = vmatpush.msra.mxu0 %v87
    %187 = vmatpush.msra.mxu0 %v84
    %188 = vmatpush.msra.mxu0 %v81
    %189 = vmatpush.msra.mxu0 %v78
    %190 = vmatpush.msra.mxu0 %v75
    %191 = vmatpush.msra.mxu0 %v72
    %192 = vmatpush.msra.mxu0 %v69
    %193 = vmatpush.msra.mxu0 %v66
    %194 = vmatmul.f32.gmra.mxu0 %v60
    %v195 = vpop.f32.mrf.mxu0
    %v196 = vadd.f32 %v116, %v195
    %197 = vmatmul.f32.gmra.mxu0 %v61
    %v198 = vpop.f32.mrf.mxu0
    %v199 = vadd.f32 %v116, %v198
    %200 = vmatmul.f32.gmra.mxu0 %v62
    %v201 = vpop.f32.mrf.mxu0
    %v202 = vadd.f32 %v116, %v201
    %203 = vmatmul.f32.gmra.mxu0 %v63
    %v204 = vpop.f32.mrf.mxu0
    %v205 = vadd.f32 %v116, %v204
    %206 = vdwg.mxu0
    %207 = vst [vmem:[#allocation8] sm:$0xff] %v138
    %208 = vst [vmem:[#allocation8 + $0x8] sm:$0xff] %v167
    %209 = vst [vmem:[#allocation8 + $0x10] sm:$0xff] %v196
    %210 = vst [vmem:[#allocation8 + $0x18] sm:$0xff] %v141
    %211 = vst [vmem:[#allocation8 + $0x20] sm:$0xff] %v170
    %212 = vst [vmem:[#allocation8 + $0x28] sm:$0xff] %v199
    %213 = vst [vmem:[#allocation8 + $0x30] sm:$0xff] %v144
    %214 = vst [vmem:[#allocation8 + $0x38] sm:$0xff] %v173
    %215 = vst [vmem:[#allocation8 + $0x40] sm:$0xff] %v202
    %216 = vst [vmem:[#allocation8 + $0x48] sm:$0xff] %v147
    %217 = vst [vmem:[#allocation8 + $0x50] sm:$0xff] %v176
    %218 = vst [vmem:[#allocation8 + $0x58] sm:$0xff] %v205
    // Predicated region
    $region26: #{tpu_custom_call.1} parent=1 // pred_check
      _
    $region27: #{tpu_custom_call.1} parent=1 // pred_check_branch
      %220 = sbr.rel (0) target = $region29
    $region28: #{tpu_custom_call.1} parent=1 // pred_region
      %222 = vsyncadd [#allocation4], 0
      %s223 = sshll.u32 [#allocation8], 4
      %s224 = int_to_ptr.vmem [resolvable:$true] %s223
      %s225 = sshll.u32 %s3, 4
      %s226 = int_to_ptr.hbm [resolvable:$true] %s225
      %231 = dma.vmem_to_hbm [thread:$0]  %s224, 1536, %s226, [#allocation4], 384, 384, 24
    $region29: #{tpu_custom_call.1} parent=1 // pred_fallthru
      _
    // Predicated region
    $region30: #{tpu_custom_call.1} parent=1 // pred_check
      _
    $region31: #{tpu_custom_call.1} parent=1 // pred_check_branch
      %233 = sbr.rel (0) target = $region33
    $region32: #{tpu_custom_call.1} parent=1 // pred_region
      %235 = dma.done [#allocation4], 1536
    $region33: #{tpu_custom_call.1} parent=1 // pred_fallthru
      _
    %236 = vsyncpa [#allocation3], 1
    %237 = vsyncpa [#allocation6], 1
    %238 = vsyncpa [#allocation4], 1

</llo_original>
